<compile_context>
chip_gen: v6e
topology: v6e:2x2x1
jax: 0.10.0
libtpu: 0.0.40
codegen_flags: <defaults>
</compile_context>

<pallas_src>
import functools
import math

import jax
import jax.numpy as jnp
from jax import lax
from jax.experimental import pallas as pl
from jax.experimental.pallas import tpu as pltpu

_LANES = 128
# Conservative budget for double-buffered input tiles + in-kernel temporaries.
_VMEM_TILE_BUDGET = 8 * 1024 * 1024


def _sigmoid_one_push(x):
    # sigmoid(x) == 0.5 * (tanh(x/2) + 1): a single EUP transcendental.
    return 0.5 * jnp.tanh(0.5 * x) + 0.5


def _pow_p(x, p):
    if p == 1:
        return x
    if isinstance(p, int) and p >= 2:
        out = x
        for _ in range(p - 1):
            out = out * x
        return out
    # TODO(synk): non-integer p falls back to pow (exp/log EUP path).
    return x ** p


def _pick_tiling(total, limit, quantum):
    """Split `total` into tiles <= limit, multiple of `quantum` (unless a
    single tile equal to the full extent covers everything)."""
    limit = max(quantum, (int(limit) // quantum) * quantum)
    if total <= limit:
        return 1, total
    n = math.ceil(total / limit)
    tile = math.ceil(math.ceil(total / n) / quantum) * quantum
    tile = min(tile, limit)
    n = math.ceil(total / tile)
    return n, tile


# ---------------------------------------------------------------------------
# Dense path kernel: logits (1, C, TR, 128), labels (1, TR, 128) int8/int32.
# Accumulators (1, C, 8, 128) f32, resident across the spatial grid axis.
# ---------------------------------------------------------------------------
def _dice_dense_kernel(logits_ref, label_ref, numer_ref, denom_ref, *,
                       p, num_channels, tile_rows, tiles_per_split, nsplit,
                       total_rows, needs_mask):
    s = pl.program_id(1)

    @pl.when(s == 0)
    def _init():
        numer_ref[...] = jnp.zeros_like(numer_ref)
        denom_ref[...] = jnp.zeros_like(denom_ref)

    lab = label_ref[0].astype(jnp.int32)                         # (TR, 128)

    if needs_mask:
        if nsplit > 1:
            t = (pl.program_id(0) % nsplit) * tiles_per_split + s
        else:
            t = s
        row_ids = lax.broadcasted_iota(jnp.int32, (tile_rows, _LANES), 0)
        in_extent = (t * tile_rows + row_ids) < total_rows       # (TR,128)

    vreg_aligned = (tile_rows % 8 == 0)

    for c in range(num_channels):
        probs = _sigmoid_one_push(logits_ref[0, c].astype(jnp.float32))
        onehot = lab == c
        probs_p = _pow_p(probs, p)
        if needs_mask:
            onehot = jnp.logical_and(onehot, in_extent)
            probs_p = jnp.where(in_extent, probs_p, 0.0)
        numer_t = jnp.where(onehot, probs, 0.0)
        # Fold probs**p and the one-hot count into one reduction tree.
        denom_t = probs_p + onehot.astype(jnp.float32)
        if vreg_aligned:
            # (TR,128) -> (TR//8, 8, 128) is layout-free; sum(0) = vreg adds.
            numer_ref[0, c] += numer_t.reshape(tile_rows // 8, 8, _LANES).sum(axis=0)
            denom_ref[0, c] += denom_t.reshape(tile_rows // 8, 8, _LANES).sum(axis=0)
        else:
            # Tiny single-tile fallback (TR == R < 8k and not a multiple of 8).
            numer_ref[0, c, 0, :] += jnp.sum(numer_t, axis=0)
            denom_ref[0, c, 0, :] += jnp.sum(denom_t, axis=0)


# ---------------------------------------------------------------------------
# Flat path kernel (HW not 128-aligned): logits (1, C, TC), labels (1, 1, TC).
# Accumulators (1, C, 1) f32, resident across the spatial grid axis.
# ---------------------------------------------------------------------------
def _dice_flat_kernel(logits_ref, label_ref, numer_ref, denom_ref, *,
                      p, num_channels, tile_cols, tiles_per_split, nsplit,
                      total_cols, needs_mask):
    s = pl.program_id(1)

    @pl.when(s == 0)
    def _init():
        numer_ref[...] = jnp.zeros_like(numer_ref)
        denom_ref[...] = jnp.zeros_like(denom_ref)

    probs = _sigmoid_one_push(logits_ref[0].astype(jnp.float32))   # (C, TC)
    lab = label_ref[0].astype(jnp.int32)                           # (1, TC)
    chan = lax.broadcasted_iota(jnp.int32, (num_channels, tile_cols), 0)
    onehot = lab == chan                                           # (C, TC)
    probs_p = _pow_p(probs, p)
    if needs_mask:
        if nsplit > 1:
            t = (pl.program_id(0) % nsplit) * tiles_per_split + s
        else:
            t = s
        col_ids = lax.broadcasted_iota(jnp.int32, (num_channels, tile_cols), 1)
        in_extent = (t * tile_cols + col_ids) < total_cols
        onehot = jnp.logical_and(onehot, in_extent)
        probs_p = jnp.where(in_extent, probs_p, 0.0)
    numer_t = jnp.where(onehot, probs, 0.0)
    denom_t = probs_p + onehot.astype(jnp.float32)
    numer_ref[0] += jnp.sum(numer_t, axis=-1, keepdims=True)       # (C, 1)
    denom_ref[0] += jnp.sum(denom_t, axis=-1, keepdims=True)


def batch_soft_dice_loss(logits, label, *, p=1, smooth=1, weight=None,
                         ignore_index=-100,
                         vmem_tile_budget=_VMEM_TILE_BUDGET,
                         max_tile_rows=None):
    """logits: (N, C, H, W) float (bf16 recommended); label: (N, H, W) int."""
    N, C, H, W = logits.shape
    HW = H * W
    eb = jnp.dtype(logits.dtype).itemsize

    # Label stream: remap ignore_index -> -1 (outside [0, C), so it hits no
    # channel's one-hot) and narrow to int8 when C fits -> 4x less HBM.
    label_i32 = label.astype(jnp.int32)
    label_dt = jnp.int8 if C <= 127 else jnp.int32
    lab_flat = jnp.where(label_i32 == ignore_index, -1, label_i32)
    lab_flat = lab_flat.astype(label_dt).reshape(N, HW)
    lab_eb = jnp.dtype(label_dt).itemsize

    logits_flat = logits.reshape(N, C, HW)   # free contiguous collapse

    if HW % _LANES == 0:
        # ------------------ dense path: (N, C, R, 128) tiles ------------------
        R = HW // _LANES
        sub = 32 if label_dt == jnp.int8 else (16 if eb == 2 else 8)
        # double-buffered logits + label rows + ~6 f32 temporaries per row
        per_row = _LANES * (2 * C * eb + 2 * lab_eb + 6 * 4)
        max_rows = vmem_tile_budget // per_row
        if max_tile_rows is not None:
            max_rows = min(max_rows, max_tile_rows)
        num_tiles, tile_rows = _pick_tiling(R, max_rows, sub)

        nsplit = 2 if (N % 2 == 1 and num_tiles >= 2) else 1
        tps = math.ceil(num_tiles / nsplit)
        needs_mask = (nsplit * tps * tile_rows) != R

        logits_in = logits_flat.reshape(N, C, R, _LANES)   # free
        label_in = lab_flat.reshape(N, R, _LANES)          # free

        def nb(pi):
            return pi // nsplit if nsplit > 1 else pi

        def tmap(pi, si):
            t = (pi % nsplit) * tps + si if nsplit > 1 else si
            if nsplit * tps != num_tiles:
                t = jnp.minimum(t, num_tiles - 1)   # clamp the overflow tile
            return t

        kernel = functools.partial(
            _dice_dense_kernel, p=p, num_channels=C, tile_rows=tile_rows,
            tiles_per_split=tps, nsplit=nsplit, total_rows=R,
            needs_mask=needs_mask)

        numer, denom = pl.pallas_call(
            kernel,
            out_shape=(jax.ShapeDtypeStruct((N * nsplit, C, 8, _LANES), jnp.float32),
                       jax.ShapeDtypeStruct((N * nsplit, C, 8, _LANES), jnp.float32)),
            grid_spec=pltpu.PrefetchScalarGridSpec(
                num_scalar_prefetch=0,
                grid=(N * nsplit, tps),
                in_specs=[
                    pl.BlockSpec((1, C, tile_rows, _LANES),
                                 lambda pi, si: (nb(pi), 0, tmap(pi, si), 0)),
                    pl.BlockSpec((1, tile_rows, _LANES),
                                 lambda pi, si: (nb(pi), tmap(pi, si), 0)),
                ],
                out_specs=[
                    pl.BlockSpec((1, C, 8, _LANES), lambda pi, si: (pi, 0, 0, 0)),
                    pl.BlockSpec((1, C, 8, _LANES), lambda pi, si: (pi, 0, 0, 0)),
                ],
            ),
            compiler_params=pltpu.CompilerParams(
                dimension_semantics=("parallel", "arbitrary")),
        )(logits_in, label_in)

        numer_nc = numer.reshape(N, nsplit, C, 8 * _LANES).sum(axis=(1, 3))
        denom_nc = denom.reshape(N, nsplit, C, 8 * _LANES).sum(axis=(1, 3))
    else:
        # -------- flat path (HW not 128-aligned): no pad / copy of logits -----
        sub_cols = 8 * _LANES
        cpad = max(8, math.ceil(C / 8) * 8)
        per_chunk = (2 * cpad * _LANES * eb          # double-buffered logits
                     + 2 * 32 * _LANES               # double-buffered labels
                     + 6 * cpad * _LANES * 4)        # f32 temporaries
        max_cols = max(sub_cols, (vmem_tile_budget // per_chunk) * _LANES)
        if max_tile_rows is not None:
            max_cols = min(max_cols, max_tile_rows * _LANES)
        num_tiles, tile_cols = _pick_tiling(HW, max_cols, sub_cols)

        nsplit = 2 if (N % 2 == 1 and num_tiles >= 2) else 1
        tps = math.ceil(num_tiles / nsplit)
        needs_mask = (nsplit * tps * tile_cols) != HW

        label_in = lab_flat.reshape(N, 1, HW)   # free; keeps block dims legal

        def nb(pi):
            return pi // nsplit if nsplit > 1 else pi

        def tmap(pi, si):
            t = (pi % nsplit) * tps + si if nsplit > 1 else si
            if nsplit * tps != num_tiles:
                t = jnp.minimum(t, num_tiles - 1)
            return t

        kernel = functools.partial(
            _dice_flat_kernel, p=p, num_channels=C, tile_cols=tile_cols,
            tiles_per_split=tps, nsplit=nsplit, total_cols=HW,
            needs_mask=needs_mask)

        numer, denom = pl.pallas_call(
            kernel,
            out_shape=(jax.ShapeDtypeStruct((N * nsplit, C, 1), jnp.float32),
                       jax.ShapeDtypeStruct((N * nsplit, C, 1), jnp.float32)),
            grid_spec=pltpu.PrefetchScalarGridSpec(
                num_scalar_prefetch=0,
                grid=(N * nsplit, tps),
                in_specs=[
                    pl.BlockSpec((1, C, tile_cols),
                                 lambda pi, si: (nb(pi), 0, tmap(pi, si))),
                    pl.BlockSpec((1, 1, tile_cols),
                                 lambda pi, si: (nb(pi), 0, tmap(pi, si))),
                ],
                out_specs=[
                    pl.BlockSpec((1, C, 1), lambda pi, si: (pi, 0, 0)),
                    pl.BlockSpec((1, C, 1), lambda pi, si: (pi, 0, 0)),
                ],
            ),
            compiler_params=pltpu.CompilerParams(
                dimension_semantics=("parallel", "arbitrary")),
        )(logits_flat, label_in)

        numer_nc = numer.reshape(N, nsplit, C).sum(axis=1)
        denom_nc = denom.reshape(N, nsplit, C).sum(axis=1)

    # Tiny finishing arithmetic in plain JAX (matches the PyTorch module).
    if weight is not None:
        w = jnp.asarray(weight, dtype=jnp.float32).reshape(1, -1)
        numer_nc = numer_nc * w
        denom_nc = denom_nc * w
    numer_tot = jnp.sum(numer_nc)
    denom_tot = jnp.sum(denom_nc)
    return 1.0 - (2.0 * numer_tot + smooth) / (denom_tot + smooth)


def _reference_loss(logits, label, p, smooth, weight, ignore_index):
    """Pure-JAX reference matching the PyTorch BatchSoftDiceLoss forward."""
    C = logits.shape[1]
    valid = label != ignore_index
    lab_clamped = jnp.where(valid, label, 0)
    one_hot = jax.nn.one_hot(lab_clamped, C, axis=1, dtype=jnp.float32)
    one_hot = one_hot * valid[:, None, :, :].astype(jnp.float32)
    probs = jax.nn.sigmoid(logits.astype(jnp.float32))
    numer = jnp.sum(probs * one_hot, axis=(2, 3))
    denom = jnp.sum(probs ** p + one_hot ** p, axis=(2, 3))
    if weight is not None:
        w = jnp.asarray(weight, dtype=jnp.float32).reshape(1, -1)
        numer = numer * w
        denom = denom * w
    return 1.0 - (2.0 * jnp.sum(numer) + smooth) / (jnp.sum(denom) + smooth)


if __name__ == "__main__":
    root = jax.random.PRNGKey(0)
    k1, k2, k3 = jax.random.split(root, 3)

    # Case 1: 128-aligned spatial extent (16*16), N=2, C=4, p=1, ignore=-100.
    ka, kb, kc = jax.random.split(k1, 3)
    N, C, H, W = 2, 4, 16, 16
    logits = jax.random.normal(ka, (N, C, H, W), dtype=jnp.float32)
    label = jax.random.randint(kb, (N, H, W), 0, C, dtype=jnp.int32)
    label = jnp.where(jax.random.bernoulli(kc, 0.1, (N, H, W)),
                      jnp.int32(-100), label)
    loss = jax.block_until_ready(batch_soft_dice_loss(logits, label))
    exp = _reference_loss(logits, label, 1, 1, None, -100)
    assert jnp.allclose(loss, exp, atol=5e-5, rtol=5e-5), (loss, exp)

    # Case 2: non-aligned extent (10*10) -> flat path (no pad copy), p=2,
    # per-class weights, ignore_index=255.
    ka, kb = jax.random.split(k2)
    logits2 = jax.random.normal(ka, (1, 3, 10, 10), dtype=jnp.float32)
    label2 = jax.random.randint(kb, (1, 10, 10), 0, 3, dtype=jnp.int32)
    w2 = [0.2, 0.3, 0.5]
    loss2 = jax.block_until_ready(
        batch_soft_dice_loss(logits2, label2, p=2, smooth=1, weight=w2,
                             ignore_index=255))
    exp2 = _reference_loss(logits2, label2, 2, 1, w2, 255)
    assert jnp.allclose(loss2, exp2, atol=5e-5, rtol=5e-5), (loss2, exp2)

    # Case 3: bf16 logits, N=1, forced multi-tile reduction -> exercises the
    # two-way parallel split, the clamped+masked overflow tile and the ragged
    # last row-tile mask.
    ka, kb, kc = jax.random.split(k3, 3)
    logits3 = jax.random.normal(ka, (1, 4, 96, 96),
                                dtype=jnp.float32).astype(jnp.bfloat16)
    label3 = jax.random.randint(kb, (1, 96, 96), 0, 4, dtype=jnp.int32)
    label3 = jnp.where(jax.random.bernoulli(kc, 0.1, (1, 96, 96)),
                       jnp.int32(-100), label3)
    loss3 = jax.block_until_ready(
        batch_soft_dice_loss(logits3, label3, max_tile_rows=32))
    exp3 = _reference_loss(logits3, label3, 1, 1, None, -100)
    assert jnp.allclose(loss3, exp3, atol=2e-4, rtol=2e-4), (loss3, exp3)

    print("KERNEL_OK")
</pallas_src>

<mosaic_0001>
module attributes {stable_mosaic.version = 11 : i64} {
  func.func @_dice_dense_kernel(%arg0: i32, %arg1: i32, %arg2: memref<1x4x2x128xf32, #tpu.memory_space<vmem>>, %arg3: memref<1x2x128xi8, #tpu.memory_space<vmem>>, %arg4: memref<1x4x8x128xf32, #tpu.memory_space<vmem>>, %arg5: memref<1x4x8x128xf32, #tpu.memory_space<vmem>>) attributes {dimension_semantics = [#tpu.dimension_semantics<parallel>, #tpu.dimension_semantics<arbitrary>], iteration_bounds = array<i64: 2, 1>, scalar_prefetch = 0 : i64, scratch_operands = 0 : i64, tpu.core_type = #tpu.core_type<tc>, window_params = [{transform_indices = @transform_0, window_bounds = array<i64: 1, 4, 2, 128>}, {transform_indices = @transform_1, window_bounds = array<i64: 1, 2, 128>}, {transform_indices = @transform_2, window_bounds = array<i64: 1, 4, 8, 128>}, {transform_indices = @transform_3, window_bounds = array<i64: 1, 4, 8, 128>}]} {
    %c0_i32 = arith.constant 0 : i32
    %0 = arith.cmpi eq, %arg1, %c0_i32 : i32
    %1 = arith.extui %0 : i1 to i32
    %c0_i32_0 = arith.constant 0 : i32
    %2 = arith.cmpi ne, %1, %c0_i32_0 : i32
    scf.if %2 {
      %cst_104 = arith.constant 0.000000e+00 : f32
      %126 = vector.broadcast %cst_104 : f32 to vector<1x4x8x128xf32>
      %c0_105 = arith.constant 0 : index
      %c0_106 = arith.constant 0 : index
      %c0_107 = arith.constant 0 : index
      %c0_108 = arith.constant 0 : index
      %127 = vector.load %arg4[%c0_105, %c0_106, %c0_107, %c0_108] : memref<1x4x8x128xf32, #tpu.memory_space<vmem>>, vector<1x4x8x128xf32>
      tpu.vector_store %arg4[%c0_105, %c0_106, %c0_107, %c0_108], %126 {strides = array<i32>} : memref<1x4x8x128xf32, #tpu.memory_space<vmem>>, vector<1x4x8x128xf32>,
      %cst_109 = arith.constant 0.000000e+00 : f32
      %128 = vector.broadcast %cst_109 : f32 to vector<1x4x8x128xf32>
      %c0_110 = arith.constant 0 : index
      %c0_111 = arith.constant 0 : index
      %c0_112 = arith.constant 0 : index
      %c0_113 = arith.constant 0 : index
      %129 = vector.load %arg5[%c0_110, %c0_111, %c0_112, %c0_113] : memref<1x4x8x128xf32, #tpu.memory_space<vmem>>, vector<1x4x8x128xf32>
      tpu.vector_store %arg5[%c0_110, %c0_111, %c0_112, %c0_113], %128 {strides = array<i32>} : memref<1x4x8x128xf32, #tpu.memory_space<vmem>>, vector<1x4x8x128xf32>,
    } else {
    }
    %c0 = arith.constant 0 : index
    %c0_1 = arith.constant 0 : index
    %c0_2 = arith.constant 0 : index
    %3 = vector.load %arg3[%c0, %c0_1, %c0_2] : memref<1x2x128xi8, #tpu.memory_space<vmem>>, vector<1x2x128xi8>
    %4 = vector.shape_cast %3 : vector<1x2x128xi8> to vector<2x128xi8>
    %5 = arith.extsi %4 : vector<2x128xi8> to vector<2x128xi32>
    %c0_3 = arith.constant 0 : index
    %c0_4 = arith.constant 0 : index
    %c0_5 = arith.constant 0 : index
    %c0_6 = arith.constant 0 : index
    %6 = vector.load %arg2[%c0_3, %c0_4, %c0_5, %c0_6] : memref<1x4x2x128xf32, #tpu.memory_space<vmem>>, vector<1x1x2x128xf32>
    %7 = vector.shape_cast %6 : vector<1x1x2x128xf32> to vector<2x128xf32>
    %cst = arith.constant 5.000000e-01 : f32
    %8 = vector.broadcast %cst : f32 to vector<2x128xf32>
    %9 = arith.mulf %8, %7 : vector<2x128xf32>
    %10 = math.tanh %9 : vector<2x128xf32>
    %cst_7 = arith.constant 5.000000e-01 : f32
    %11 = vector.broadcast %cst_7 : f32 to vector<2x128xf32>
    %12 = arith.mulf %11, %10 : vector<2x128xf32>
    %cst_8 = arith.constant 5.000000e-01 : f32
    %13 = vector.broadcast %cst_8 : f32 to vector<2x128xf32>
    %14 = arith.addf %12, %13 : vector<2x128xf32>
    %c0_i32_9 = arith.constant 0 : i32
    %15 = vector.broadcast %c0_i32_9 : i32 to vector<2x128xi32>
    %16 = arith.cmpi eq, %5, %15 : vector<2x128xi32>
    %cst_10 = arith.constant 0.000000e+00 : f32
    %17 = vector.broadcast %cst_10 : f32 to vector<2x128xf32>
    %18 = arith.select %16, %14, %17 : vector<2x128xi1>, vector<2x128xf32>
    %19 = arith.extui %16 : vector<2x128xi1> to vector<2x128xi32>
    %20 = arith.sitofp %19 : vector<2x128xi32> to vector<2x128xf32>
    %21 = arith.addf %14, %20 : vector<2x128xf32>
    %c0_11 = arith.constant 0 : index
    %c0_12 = arith.constant 0 : index
    %c0_13 = arith.constant 0 : index
    %c0_14 = arith.constant 0 : index
    %22 = vector.load %arg4[%c0_11, %c0_12, %c0_13, %c0_14] : memref<1x4x8x128xf32, #tpu.memory_space<vmem>>, vector<1x1x1x128xf32>
    %23 = vector.shape_cast %22 : vector<1x1x1x128xf32> to vector<128xf32>
    %cst_15 = arith.constant dense<0.000000e+00> : vector<128xf32>
    %24 = vector.multi_reduction <add>, %18, %cst_15 [0] : vector<2x128xf32> to vector<128xf32>
    %25 = arith.addf %23, %24 : vector<128xf32>
    %c0_16 = arith.constant 0 : index
    %c0_17 = arith.constant 0 : index
    %c0_18 = arith.constant 0 : index
    %c0_19 = arith.constant 0 : index
    %26 = vector.load %arg4[%c0_16, %c0_17, %c0_18, %c0_19] : memref<1x4x8x128xf32, #tpu.memory_space<vmem>>, vector<1x1x1x128xf32>
    %27 = vector.shape_cast %26 : vector<1x1x1x128xf32> to vector<128xf32>
    %28 = vector.shape_cast %25 : vector<128xf32> to vector<1x1x1x128xf32>
    tpu.vector_store %arg4[%c0_16, %c0_17, %c0_18, %c0_19], %28 {strides = array<i32>} : memref<1x4x8x128xf32, #tpu.memory_space<vmem>>, vector<1x1x1x128xf32>,
    %c0_20 = arith.constant 0 : index
    %c0_21 = arith.constant 0 : index
    %c0_22 = arith.constant 0 : index
    %c0_23 = arith.constant 0 : index
    %29 = vector.load %arg5[%c0_20, %c0_21, %c0_22, %c0_23] : memref<1x4x8x128xf32, #tpu.memory_space<vmem>>, vector<1x1x1x128xf32>
    %30 = vector.shape_cast %29 : vector<1x1x1x128xf32> to vector<128xf32>
    %cst_24 = arith.constant dense<0.000000e+00> : vector<128xf32>
    %31 = vector.multi_reduction <add>, %21, %cst_24 [0] : vector<2x128xf32> to vector<128xf32>
    %32 = arith.addf %30, %31 : vector<128xf32>
    %c0_25 = arith.constant 0 : index
    %c0_26 = arith.constant 0 : index
    %c0_27 = arith.constant 0 : index
    %c0_28 = arith.constant 0 : index
    %33 = vector.load %arg5[%c0_25, %c0_26, %c0_27, %c0_28] : memref<1x4x8x128xf32, #tpu.memory_space<vmem>>, vector<1x1x1x128xf32>
    %34 = vector.shape_cast %33 : vector<1x1x1x128xf32> to vector<128xf32>
    %35 = vector.shape_cast %32 : vector<128xf32> to vector<1x1x1x128xf32>
    tpu.vector_store %arg5[%c0_25, %c0_26, %c0_27, %c0_28], %35 {strides = array<i32>} : memref<1x4x8x128xf32, #tpu.memory_space<vmem>>, vector<1x1x1x128xf32>,
    %c0_29 = arith.constant 0 : index
    %c1 = arith.constant 1 : index
    %c0_30 = arith.constant 0 : index
    %c0_31 = arith.constant 0 : index
    %36 = vector.load %arg2[%c0_29, %c1, %c0_30, %c0_31] : memref<1x4x2x128xf32, #tpu.memory_space<vmem>>, vector<1x1x2x128xf32>
    %37 = vector.shape_cast %36 : vector<1x1x2x128xf32> to vector<2x128xf32>
    %cst_32 = arith.constant 5.000000e-01 : f32
    %38 = vector.broadcast %cst_32 : f32 to vector<2x128xf32>
    %39 = arith.mulf %38, %37 : vector<2x128xf32>
    %40 = math.tanh %39 : vector<2x128xf32>
    %cst_33 = arith.constant 5.000000e-01 : f32
    %41 = vector.broadcast %cst_33 : f32 to vector<2x128xf32>
    %42 = arith.mulf %41, %40 : vector<2x128xf32>
    %cst_34 = arith.constant 5.000000e-01 : f32
    %43 = vector.broadcast %cst_34 : f32 to vector<2x128xf32>
    %44 = arith.addf %42, %43 : vector<2x128xf32>
    %c1_i32 = arith.constant 1 : i32
    %45 = vector.broadcast %c1_i32 : i32 to vector<2x128xi32>
    %46 = arith.cmpi eq, %5, %45 : vector<2x128xi32>
    %cst_35 = arith.constant 0.000000e+00 : f32
    %47 = vector.broadcast %cst_35 : f32 to vector<2x128xf32>
    %48 = arith.select %46, %44, %47 : vector<2x128xi1>, vector<2x128xf32>
    %49 = arith.extui %46 : vector<2x128xi1> to vector<2x128xi32>
    %50 = arith.sitofp %49 : vector<2x128xi32> to vector<2x128xf32>
    %51 = arith.addf %44, %50 : vector<2x128xf32>
    %c0_36 = arith.constant 0 : index
    %c1_37 = arith.constant 1 : index
    %c0_38 = arith.constant 0 : index
    %c0_39 = arith.constant 0 : index
    %52 = vector.load %arg4[%c0_36, %c1_37, %c0_38, %c0_39] : memref<1x4x8x128xf32, #tpu.memory_space<vmem>>, vector<1x1x1x128xf32>
    %53 = vector.shape_cast %52 : vector<1x1x1x128xf32> to vector<128xf32>
    %cst_40 = arith.constant dense<0.000000e+00> : vector<128xf32>
    %54 = vector.multi_reduction <add>, %48, %cst_40 [0] : vector<2x128xf32> to vector<128xf32>
    %55 = arith.addf %53, %54 : vector<128xf32>
    %c0_41 = arith.constant 0 : index
    %c1_42 = arith.constant 1 : index
    %c0_43 = arith.constant 0 : index
    %c0_44 = arith.constant 0 : index
    %56 = vector.load %arg4[%c0_41, %c1_42, %c0_43, %c0_44] : memref<1x4x8x128xf32, #tpu.memory_space<vmem>>, vector<1x1x1x128xf32>
    %57 = vector.shape_cast %56 : vector<1x1x1x128xf32> to vector<128xf32>
    %58 = vector.shape_cast %55 : vector<128xf32> to vector<1x1x1x128xf32>
    tpu.vector_store %arg4[%c0_41, %c1_42, %c0_43, %c0_44], %58 {strides = array<i32>} : memref<1x4x8x128xf32, #tpu.memory_space<vmem>>, vector<1x1x1x128xf32>,
    %c0_45 = arith.constant 0 : index
    %c1_46 = arith.constant 1 : index
    %c0_47 = arith.constant 0 : index
    %c0_48 = arith.constant 0 : index
    %59 = vector.load %arg5[%c0_45, %c1_46, %c0_47, %c0_48] : memref<1x4x8x128xf32, #tpu.memory_space<vmem>>, vector<1x1x1x128xf32>
    %60 = vector.shape_cast %59 : vector<1x1x1x128xf32> to vector<128xf32>
    %cst_49 = arith.constant dense<0.000000e+00> : vector<128xf32>
    %61 = vector.multi_reduction <add>, %51, %cst_49 [0] : vector<2x128xf32> to vector<128xf32>
    %62 = arith.addf %60, %61 : vector<128xf32>
    %c0_50 = arith.constant 0 : index
    %c1_51 = arith.constant 1 : index
    %c0_52 = arith.constant 0 : index
    %c0_53 = arith.constant 0 : index
    %63 = vector.load %arg5[%c0_50, %c1_51, %c0_52, %c0_53] : memref<1x4x8x128xf32, #tpu.memory_space<vmem>>, vector<1x1x1x128xf32>
    %64 = vector.shape_cast %63 : vector<1x1x1x128xf32> to vector<128xf32>
    %65 = vector.shape_cast %62 : vector<128xf32> to vector<1x1x1x128xf32>
    tpu.vector_store %arg5[%c0_50, %c1_51, %c0_52, %c0_53], %65 {strides = array<i32>} : memref<1x4x8x128xf32, #tpu.memory_space<vmem>>, vector<1x1x1x128xf32>,
    %c0_54 = arith.constant 0 : index
    %c2 = arith.constant 2 : index
    %c0_55 = arith.constant 0 : index
    %c0_56 = arith.constant 0 : index
    %66 = vector.load %arg2[%c0_54, %c2, %c0_55, %c0_56] : memref<1x4x2x128xf32, #tpu.memory_space<vmem>>, vector<1x1x2x128xf32>
    %67 = vector.shape_cast %66 : vector<1x1x2x128xf32> to vector<2x128xf32>
    %cst_57 = arith.constant 5.000000e-01 : f32
    %68 = vector.broadcast %cst_57 : f32 to vector<2x128xf32>
    %69 = arith.mulf %68, %67 : vector<2x128xf32>
    %70 = math.tanh %69 : vector<2x128xf32>
    %cst_58 = arith.constant 5.000000e-01 : f32
    %71 = vector.broadcast %cst_58 : f32 to vector<2x128xf32>
    %72 = arith.mulf %71, %70 : vector<2x128xf32>
    %cst_59 = arith.constant 5.000000e-01 : f32
    %73 = vector.broadcast %cst_59 : f32 to vector<2x128xf32>
    %74 = arith.addf %72, %73 : vector<2x128xf32>
    %c2_i32 = arith.constant 2 : i32
    %75 = vector.broadcast %c2_i32 : i32 to vector<2x128xi32>
    %76 = arith.cmpi eq, %5, %75 : vector<2x128xi32>
    %cst_60 = arith.constant 0.000000e+00 : f32
    %77 = vector.broadcast %cst_60 : f32 to vector<2x128xf32>
    %78 = arith.select %76, %74, %77 : vector<2x128xi1>, vector<2x128xf32>
    %79 = arith.extui %76 : vector<2x128xi1> to vector<2x128xi32>
    %80 = arith.sitofp %79 : vector<2x128xi32> to vector<2x128xf32>
    %81 = arith.addf %74, %80 : vector<2x128xf32>
    %c0_61 = arith.constant 0 : index
    %c2_62 = arith.constant 2 : index
    %c0_63 = arith.constant 0 : index
    %c0_64 = arith.constant 0 : index
    %82 = vector.load %arg4[%c0_61, %c2_62, %c0_63, %c0_64] : memref<1x4x8x128xf32, #tpu.memory_space<vmem>>, vector<1x1x1x128xf32>
    %83 = vector.shape_cast %82 : vector<1x1x1x128xf32> to vector<128xf32>
    %cst_65 = arith.constant dense<0.000000e+00> : vector<128xf32>
    %84 = vector.multi_reduction <add>, %78, %cst_65 [0] : vector<2x128xf32> to vector<128xf32>
    %85 = arith.addf %83, %84 : vector<128xf32>
    %c0_66 = arith.constant 0 : index
    %c2_67 = arith.constant 2 : index
    %c0_68 = arith.constant 0 : index
    %c0_69 = arith.constant 0 : index
    %86 = vector.load %arg4[%c0_66, %c2_67, %c0_68, %c0_69] : memref<1x4x8x128xf32, #tpu.memory_space<vmem>>, vector<1x1x1x128xf32>
    %87 = vector.shape_cast %86 : vector<1x1x1x128xf32> to vector<128xf32>
    %88 = vector.shape_cast %85 : vector<128xf32> to vector<1x1x1x128xf32>
    tpu.vector_store %arg4[%c0_66, %c2_67, %c0_68, %c0_69], %88 {strides = array<i32>} : memref<1x4x8x128xf32, #tpu.memory_space<vmem>>, vector<1x1x1x128xf32>,
    %c0_70 = arith.constant 0 : index
    %c2_71 = arith.constant 2 : index
    %c0_72 = arith.constant 0 : index
    %c0_73 = arith.constant 0 : index
    %89 = vector.load %arg5[%c0_70, %c2_71, %c0_72, %c0_73] : memref<1x4x8x128xf32, #tpu.memory_space<vmem>>, vector<1x1x1x128xf32>
    %90 = vector.shape_cast %89 : vector<1x1x1x128xf32> to vector<128xf32>
    %cst_74 = arith.constant dense<0.000000e+00> : vector<128xf32>
    %91 = vector.multi_reduction <add>, %81, %cst_74 [0] : vector<2x128xf32> to vector<128xf32>
    %92 = arith.addf %90, %91 : vector<128xf32>
    %c0_75 = arith.constant 0 : index
    %c2_76 = arith.constant 2 : index
    %c0_77 = arith.constant 0 : index
    %c0_78 = arith.constant 0 : index
    %93 = vector.load %arg5[%c0_75, %c2_76, %c0_77, %c0_78] : memref<1x4x8x128xf32, #tpu.memory_space<vmem>>, vector<1x1x1x128xf32>
    %94 = vector.shape_cast %93 : vector<1x1x1x128xf32> to vector<128xf32>
    %95 = vector.shape_cast %92 : vector<128xf32> to vector<1x1x1x128xf32>
    tpu.vector_store %arg5[%c0_75, %c2_76, %c0_77, %c0_78], %95 {strides = array<i32>} : memref<1x4x8x128xf32, #tpu.memory_space<vmem>>, vector<1x1x1x128xf32>,
    %c0_79 = arith.constant 0 : index
    %c3 = arith.constant 3 : index
    %c0_80 = arith.constant 0 : index
    %c0_81 = arith.constant 0 : index
    %96 = vector.load %arg2[%c0_79, %c3, %c0_80, %c0_81] : memref<1x4x2x128xf32, #tpu.memory_space<vmem>>, vector<1x1x2x128xf32>
    %97 = vector.shape_cast %96 : vector<1x1x2x128xf32> to vector<2x128xf32>
    %cst_82 = arith.constant 5.000000e-01 : f32
    %98 = vector.broadcast %cst_82 : f32 to vector<2x128xf32>
    %99 = arith.mulf %98, %97 : vector<2x128xf32>
    %100 = math.tanh %99 : vector<2x128xf32>
    %cst_83 = arith.constant 5.000000e-01 : f32
    %101 = vector.broadcast %cst_83 : f32 to vector<2x128xf32>
    %102 = arith.mulf %101, %100 : vector<2x128xf32>
    %cst_84 = arith.constant 5.000000e-01 : f32
    %103 = vector.broadcast %cst_84 : f32 to vector<2x128xf32>
    %104 = arith.addf %102, %103 : vector<2x128xf32>
    %c3_i32 = arith.constant 3 : i32
    %105 = vector.broadcast %c3_i32 : i32 to vector<2x128xi32>
    %106 = arith.cmpi eq, %5, %105 : vector<2x128xi32>
    %cst_85 = arith.constant 0.000000e+00 : f32
    %107 = vector.broadcast %cst_85 : f32 to vector<2x128xf32>
    %108 = arith.select %106, %104, %107 : vector<2x128xi1>, vector<2x128xf32>
    %109 = arith.extui %106 : vector<2x128xi1> to vector<2x128xi32>
    %110 = arith.sitofp %109 : vector<2x128xi32> to vector<2x128xf32>
    %111 = arith.addf %104, %110 : vector<2x128xf32>
    %c0_86 = arith.constant 0 : index
    %c3_87 = arith.constant 3 : index
    %c0_88 = arith.constant 0 : index
    %c0_89 = arith.constant 0 : index
    %112 = vector.load %arg4[%c0_86, %c3_87, %c0_88, %c0_89] : memref<1x4x8x128xf32, #tpu.memory_space<vmem>>, vector<1x1x1x128xf32>
    %113 = vector.shape_cast %112 : vector<1x1x1x128xf32> to vector<128xf32>
    %cst_90 = arith.constant dense<0.000000e+00> : vector<128xf32>
    %114 = vector.multi_reduction <add>, %108, %cst_90 [0] : vector<2x128xf32> to vector<128xf32>
    %115 = arith.addf %113, %114 : vector<128xf32>
    %c0_91 = arith.constant 0 : index
    %c3_92 = arith.constant 3 : index
    %c0_93 = arith.constant 0 : index
    %c0_94 = arith.constant 0 : index
    %116 = vector.load %arg4[%c0_91, %c3_92, %c0_93, %c0_94] : memref<1x4x8x128xf32, #tpu.memory_space<vmem>>, vector<1x1x1x128xf32>
    %117 = vector.shape_cast %116 : vector<1x1x1x128xf32> to vector<128xf32>
    %118 = vector.shape_cast %115 : vector<128xf32> to vector<1x1x1x128xf32>
    tpu.vector_store %arg4[%c0_91, %c3_92, %c0_93, %c0_94], %118 {strides = array<i32>} : memref<1x4x8x128xf32, #tpu.memory_space<vmem>>, vector<1x1x1x128xf32>,
    %c0_95 = arith.constant 0 : index
    %c3_96 = arith.constant 3 : index
    %c0_97 = arith.constant 0 : index
    %c0_98 = arith.constant 0 : index
    %119 = vector.load %arg5[%c0_95, %c3_96, %c0_97, %c0_98] : memref<1x4x8x128xf32, #tpu.memory_space<vmem>>, vector<1x1x1x128xf32>
    %120 = vector.shape_cast %119 : vector<1x1x1x128xf32> to vector<128xf32>
    %cst_99 = arith.constant dense<0.000000e+00> : vector<128xf32>
    %121 = vector.multi_reduction <add>, %111, %cst_99 [0] : vector<2x128xf32> to vector<128xf32>
    %122 = arith.addf %120, %121 : vector<128xf32>
    %c0_100 = arith.constant 0 : index
    %c3_101 = arith.constant 3 : index
    %c0_102 = arith.constant 0 : index
    %c0_103 = arith.constant 0 : index
    %123 = vector.load %arg5[%c0_100, %c3_101, %c0_102, %c0_103] : memref<1x4x8x128xf32, #tpu.memory_space<vmem>>, vector<1x1x1x128xf32>
    %124 = vector.shape_cast %123 : vector<1x1x1x128xf32> to vector<128xf32>
    %125 = vector.shape_cast %122 : vector<128xf32> to vector<1x1x1x128xf32>
    tpu.vector_store %arg5[%c0_100, %c3_101, %c0_102, %c0_103], %125 {strides = array<i32>} : memref<1x4x8x128xf32, #tpu.memory_space<vmem>>, vector<1x1x1x128xf32>,
    return
  }
  func.func @transform_0(%arg0: i32, %arg1: i32) -> (i32, i32, i32, i32) {
    %c0_i32 = arith.constant 0 : i32
    %c0_i32_0 = arith.constant 0 : i32
    %c0_i32_1 = arith.constant 0 : i32
    return %arg0, %c0_i32, %arg1, %c0_i32_0 : i32, i32, i32, i32
  }
  func.func @transform_1(%arg0: i32, %arg1: i32) -> (i32, i32, i32) {
    %c0_i32 = arith.constant 0 : i32
    %c0_i32_0 = arith.constant 0 : i32
    return %arg0, %arg1, %c0_i32 : i32, i32, i32
  }
  func.func @transform_2(%arg0: i32, %arg1: i32) -> (i32, i32, i32, i32) {
    %c0_i32 = arith.constant 0 : i32
    %c0_i32_0 = arith.constant 0 : i32
    %c0_i32_1 = arith.constant 0 : i32
    %c0_i32_2 = arith.constant 0 : i32
    return %arg0, %c0_i32, %c0_i32_0, %c0_i32_1 : i32, i32, i32, i32
  }
  func.func @transform_3(%arg0: i32, %arg1: i32) -> (i32, i32, i32, i32) {
    %c0_i32 = arith.constant 0 : i32
    %c0_i32_0 = arith.constant 0 : i32
    %c0_i32_1 = arith.constant 0 : i32
    %c0_i32_2 = arith.constant 0 : i32
    return %arg0, %c0_i32, %c0_i32_0, %c0_i32_1 : i32, i32, i32, i32
  }
}

</mosaic_0001>

<llo_original>
// kernel: tpu_custom_call.1
$region0: #{tpu_custom_call.1}
  #allocation0 [shape = 'u32[]', space=smem, size = 0x4, offset = 0x4, fixed_abs, tag = 'smem constant byte address 0x4 - core index']
  #allocation1 [shape = 'u32[144,128]{1,0:T(1,128)}', space=vmem, size = 0x12000, scoped, tag = 'internal scratch']
  %s0 = inlined_call_operand.hbm [shape: f32[2,4,2,128], index: 0, kind: input, shape index: {}]
  %s1 = inlined_call_operand.hbm [shape: s8[2,2,128], index: 1, kind: input, shape index: {}]
  %s2 = inlined_call_operand.hbm [shape: f32[2,4,8,128], index: 2, kind: output, shape index: {0}]
  %s3 = inlined_call_operand.hbm [shape: f32[2,4,8,128], index: 3, kind: output, shape index: {1}]
  %4 = xla_tuple %s2, %s3
  %s5 = sld [smem:[#allocation0]]
  $region61: #{tpu_custom_call.1} parent=0
    _
  %s7 = ssub.s32 1, %s5
  %s8 = scalar_select 0, %s7, %s5
  $region1: #{tpu_custom_call.1} parent=0
    #allocation2 [shape = 'u8[8192]{0}', space=vmem, size = 0x2000, scoped, tag = 'input window, operand 0']
    #allocation3 [shape = 's32[2]{0}', space=sflag, size = 0x8, scoped, tag = 'scoped memory for tpu_custom_call.1']
    #allocation4 [shape = 's32[2]{0}', space=sflag, size = 0x8, scoped, tag = 'scoped memory for tpu_custom_call.1']
    #allocation5 [shape = 'u8[1024]{0}', space=vmem, size = 0x400, scoped, tag = 'input window, operand 1']
    #allocation6 [shape = 's32[2]{0}', space=sflag, size = 0x8, scoped, tag = 'scoped memory for tpu_custom_call.1']
    #allocation7 [shape = 'u8[32768]{0}', space=vmem, size = 0x8000, scoped, tag = 'output window, operand 0']
    #allocation8 [shape = 'u8[32768]{0}', space=vmem, size = 0x8000, scoped, tag = 'output window, operand 1']
    #allocation9 [shape = 's32[2]{0}', space=sflag, size = 0x8, scoped, tag = 'scoped memory for tpu_custom_call.1']
    %9 = vsyncpa [#allocation3], 0
    %s10 = scalar_lea.sflag [#allocation3], 1
    %11 = vsyncpa %s10, 0
    %12 = vsyncpa [#allocation6], 0
    %s13 = scalar_lea.sflag [#allocation6], 1
    %14 = vsyncpa %s13, 0
    %15 = vsyncpa [#allocation4], 0
    %s16 = scalar_lea.sflag [#allocation4], 1
    %17 = vsyncpa %s16, 0
    %18 = vsyncpa [#allocation9], 0
    %s19 = scalar_lea.sflag [#allocation9], 1
    %20 = vsyncpa %s19, 0
    loop: start=0, step=1, limit=4
    $region2: #{tpu_custom_call.1} parent=1 // loop_pre_header
      _
    $region3: #{tpu_custom_call.1} parent=1 // loop_header
      %s22 = sphi 0, %s26
      %p23 = scmp.ge.s32.totalorder %s22, 4
      %s29 = sphi 0, %s41
      %s30 = sphi 0, %s37
      %s31 = sphi 0, %s29
      %s32 = sphi 0, %s30
      %s33 = sphi 0, %s31
      %s34 = sphi 0, %s32
      %s46 = sphi 0, %s48
      %s49 = sphi 0, %s46
      %s50 = sphi 0, %s49
      %s66 = sphi 0, %s50
      %s74 = sphi 0, %s76
      %s77 = sphi 0, %s74
      %s78 = sphi 0, %s77
      %s94 = sphi 0, %s78
      %s100 = sphi 0, %s102
      %s103 = sphi 0, %s100
      %s104 = sphi 0, %s103
      %s120 = sphi 0, %s104
      %s126 = sphi 0, %s128
      %s129 = sphi 0, %s126
      %s130 = sphi 0, %s129
      %s146 = sphi 0, %s130
    $region4: #{tpu_custom_call.1} parent=1 // loop_header_branch
      %25 = sbr.rel (%p23) target = $region8
    $region5: #{tpu_custom_call.1} parent=1 // loop_body
      %s27 = ssub.s32 %s22, 1
      %s28 = ssub.s32 %s22, 2
      %s35 = sadd.s32 1, %s30
      %p36 = scmp.ge.s32.totalorder %s35, 1
      %s37 = scalar_select %p36, 0, %s35
      %s38 = sadd.s32 1, %s29
      %s39 = scalar_select %p36, %s38, %s29
      %p40 = scmp.ge.s32.totalorder %s39, 2
      %s41 = scalar_select %p40, 0, %s39
      %s42 = ssub.s32 %s29, %s41
      %s43 = ssub.s32 %s30, %s37
      %s44 = sor.u32 %s42, %s43
      %p45 = scmp.eq.s32.totalorder %s44, 0
      %s47 = sadd.s32 %s46, 1
      %s48 = scalar_select %p45, %s46, %s47
      %p51 = pneg %p45
      %p52 = scmp.eq.s32.totalorder %s22, 1
      %p53 = por %p51, %p52
      %p54 = scmp.ne.s32.totalorder %s46, %s49
      %p55 = scmp.eq.s32.totalorder %s22, 0
      %p56 = por %p54, %p55
      %p57 = scmp.ne.s32.totalorder %s46, %s49
      %p58 = scmp.eq.s32.totalorder %s27, 1
      %p59 = por %p57, %p58
      %p60 = scmp.ne.s32.totalorder %s49, %s50
      %p61 = scmp.eq.s32.totalorder %s27, 0
      %p62 = por %p60, %p61
      %p63 = scmp.ne.s32.totalorder %s49, %s50
      %p64 = scmp.eq.s32.totalorder %s28, 1
      %p65 = por %p63, %p64
      %p67 = scmp.ne.s32.totalorder %s50, %s66
      %p68 = scmp.eq.s32.totalorder %s28, 0
      %p69 = por %p67, %p68
      %s70 = ssub.s32 %s29, %s41
      %s71 = ssub.s32 %s30, %s37
      %s72 = sor.u32 %s70, %s71
      %p73 = scmp.eq.s32.totalorder %s72, 0
      %s75 = sadd.s32 %s74, 1
      %s76 = scalar_select %p73, %s74, %s75
      %p79 = pneg %p73
      %p80 = scmp.eq.s32.totalorder %s22, 1
      %p81 = por %p79, %p80
      %p82 = scmp.ne.s32.totalorder %s74, %s77
      %p83 = scmp.eq.s32.totalorder %s22, 0
      %p84 = por %p82, %p83
      %p85 = scmp.ne.s32.totalorder %s74, %s77
      %p86 = scmp.eq.s32.totalorder %s27, 1
      %p87 = por %p85, %p86
      %p88 = scmp.ne.s32.totalorder %s77, %s78
      %p89 = scmp.eq.s32.totalorder %s27, 0
      %p90 = por %p88, %p89
      %p91 = scmp.ne.s32.totalorder %s77, %s78
      %p92 = scmp.eq.s32.totalorder %s28, 1
      %p93 = por %p91, %p92
      %p95 = scmp.ne.s32.totalorder %s78, %s94
      %p96 = scmp.eq.s32.totalorder %s28, 0
      %p97 = por %p95, %p96
      %s98 = ssub.s32 %s29, %s41
      %p99 = scmp.eq.s32.totalorder %s98, 0
      %s101 = sadd.s32 %s100, 1
      %s102 = scalar_select %p99, %s100, %s101
      %p105 = pneg %p99
      %p106 = scmp.eq.s32.totalorder %s22, 1
      %p107 = por %p105, %p106
      %p108 = scmp.ne.s32.totalorder %s100, %s103
      %p109 = scmp.eq.s32.totalorder %s22, 0
      %p110 = por %p108, %p109
      %p111 = scmp.ne.s32.totalorder %s100, %s103
      %p112 = scmp.eq.s32.totalorder %s27, 1
      %p113 = por %p111, %p112
      %p114 = scmp.ne.s32.totalorder %s103, %s104
      %p115 = scmp.eq.s32.totalorder %s27, 0
      %p116 = por %p114, %p115
      %p117 = scmp.ne.s32.totalorder %s103, %s104
      %p118 = scmp.eq.s32.totalorder %s28, 1
      %p119 = por %p117, %p118
      %p121 = scmp.ne.s32.totalorder %s104, %s120
      %p122 = scmp.eq.s32.totalorder %s28, 0
      %p123 = por %p121, %p122
      %s124 = ssub.s32 %s29, %s41
      %p125 = scmp.eq.s32.totalorder %s124, 0
      %s127 = sadd.s32 %s126, 1
      %s128 = scalar_select %p125, %s126, %s127
      %p131 = pneg %p125
      %p132 = scmp.eq.s32.totalorder %s22, 1
      %p133 = por %p131, %p132
      %p134 = scmp.ne.s32.totalorder %s126, %s129
      %p135 = scmp.eq.s32.totalorder %s22, 0
      %p136 = por %p134, %p135
      %p137 = scmp.ne.s32.totalorder %s126, %s129
      %p138 = scmp.eq.s32.totalorder %s27, 1
      %p139 = por %p137, %p138
      %p140 = scmp.ne.s32.totalorder %s129, %s130
      %p141 = scmp.eq.s32.totalorder %s27, 0
      %p142 = por %p140, %p141
      %p143 = scmp.ne.s32.totalorder %s129, %s130
      %p144 = scmp.eq.s32.totalorder %s28, 1
      %p145 = por %p143, %p144
      %p147 = scmp.ne.s32.totalorder %s130, %s146
      %p148 = scmp.eq.s32.totalorder %s28, 0
      %p149 = por %p147, %p148
      %p150 = scmp.le.s32.totalorder 1, %s22
      %p151 = scmp.lt.s32.totalorder %s22, 3
      %p152 = pnand %p150, %p151
      %p153 = pneg %p152
      // Predicated region
      $region9: #{tpu_custom_call.1} parent=5 // pred_check
        _
      $region10: #{tpu_custom_call.1} parent=5 // pred_check_branch
        %155 = sbr.rel (%p152) target = $region12
      $region11: #{tpu_custom_call.1} parent=5 // pred_region
        %s156 = ssub.s32 %s22, 1
      $region12: #{tpu_custom_call.1} parent=5 // pred_fallthru
        _
      %p157 = scmp.lt.s32.totalorder %s22, 2
      // Predicated region
      $region13: #{tpu_custom_call.1} parent=5 // pred_check
        %p158 = pneg %p157
      $region14: #{tpu_custom_call.1} parent=5 // pred_check_branch
        %160 = sbr.rel (%p158) target = $region16
      $region15: #{tpu_custom_call.1} parent=5 // pred_region
        // Predicated region
        $region17: #{tpu_custom_call.1} parent=15 // pred_check
          %p161 = pneg %p56
        $region18: #{tpu_custom_call.1} parent=15 // pred_check_branch
          %163 = sbr.rel (%p161) target = $region20
        $region19: #{tpu_custom_call.1} parent=15 // pred_region
          %s164 = sand.u32 %s46, 1
          %s165 = scalar_lea.sflag [#allocation3], %s164
          %s166 = sand.u32 %s46, 1
          %s167 = smul.addr %s166, 8
          %s168 = scalar_lea.vmem [#allocation2], %s167
          %s170 = ssub.s32 128, 128
          %171 = vsyncadd %s165, %s170
          %s172 = smul.addr %s29, 4
          %s173 = sadd.s32 %s30, %s172
          %s174 = smul.addr %s173, 32
          %s175 = scalar_lea.hbm %s0, %s174
          %s176 = sshll.u32 %s168, 4
          %s177 = int_to_ptr.vmem [resolvable:$true] %s176
          %182 = dma.hbm_to_vmem [thread:$0]  %s175, 128, %s177, %s165, 32, 32, 2
        $region20: #{tpu_custom_call.1} parent=15 // pred_fallthru
          _
        // Predicated region
        $region21: #{tpu_custom_call.1} parent=15 // pred_check
          %p183 = pneg %p84
        $region22: #{tpu_custom_call.1} parent=15 // pred_check_branch
          %185 = sbr.rel (%p183) target = $region24
        $region23: #{tpu_custom_call.1} parent=15 // pred_region
          %s186 = sand.u32 %s74, 1
          %s187 = scalar_lea.sflag [#allocation6], %s186
          %s188 = sand.u32 %s74, 1
          %s189 = scalar_lea.vmem [#allocation5], %s188
          %s191 = ssub.s32 16, 16
          %192 = vsyncadd %s187, %s191
          %s193 = sadd.s32 %s30, %s29
          %s194 = smul.addr %s193, 16
          %s195 = scalar_lea.hbm %s1, %s194
          %s197 = sshll.u32 %s189, 4
          %s198 = int_to_ptr.vmem [resolvable:$true] %s197
          %200 = dma.hbm_to_vmem [thread:$0]  %s195, 16, %s198, %s187
        $region24: #{tpu_custom_call.1} parent=15 // pred_fallthru
          _
      $region16: #{tpu_custom_call.1} parent=5 // pred_fallthru
        _
      %p201 = scmp.le.s32.totalorder 1, %s22
      %p202 = scmp.lt.s32.totalorder %s22, 3
      %p203 = pnand %p201, %p202
      %p204 = pneg %p203
      // Predicated region
      $region25: #{tpu_custom_call.1} parent=5 // pred_check
        _
      $region26: #{tpu_custom_call.1} parent=5 // pred_check_branch
        %206 = sbr.rel (%p203) target = $region28
      $region27: #{tpu_custom_call.1} parent=5 // pred_region
        %s207 = ssub.s32 %s22, 1
        %s208 = sand.u32 %s49, 1
        %s209 = scalar_lea.sflag [#allocation3], %s208
        %s210 = sand.u32 %s49, 1
        %s211 = smul.addr %s210, 8
        %s212 = scalar_lea.vmem [#allocation2], %s211
        // Predicated region
        $region29: #{tpu_custom_call.1} parent=27 // pred_check
          %p213 = pneg %p62
        $region30: #{tpu_custom_call.1} parent=27 // pred_check_branch
          %215 = sbr.rel (%p213) target = $region32
        $region31: #{tpu_custom_call.1} parent=27 // pred_region
          %216 = dma.done %s209, 128
        $region32: #{tpu_custom_call.1} parent=27 // pred_fallthru
          _
        %s217 = sand.u32 %s77, 1
        %s218 = scalar_lea.sflag [#allocation6], %s217
        %s219 = sand.u32 %s77, 1
        %s220 = scalar_lea.vmem [#allocation5], %s219
        // Predicated region
        $region33: #{tpu_custom_call.1} parent=27 // pred_check
          %p221 = pneg %p90
        $region34: #{tpu_custom_call.1} parent=27 // pred_check_branch
          %223 = sbr.rel (%p221) target = $region36
        $region35: #{tpu_custom_call.1} parent=27 // pred_region
          %224 = dma.done %s218, 16
        $region36: #{tpu_custom_call.1} parent=27 // pred_fallthru
          _
        %s225 = sand.u32 %s49, 1
        %s226 = scalar_lea.sflag [#allocation3], %s225
        %s227 = sand.u32 %s49, 1
        %s228 = smul.addr %s227, 8
        %s229 = scalar_lea.vmem [#allocation2], %s228
        %p230 = pneg %p62
        %p231 = pneg %p59
        %s232 = sand.u32 %s77, 1
        %s233 = scalar_lea.sflag [#allocation6], %s232
        %s234 = sand.u32 %s77, 1
        %s235 = scalar_lea.vmem [#allocation5], %s234
        %p236 = pneg %p90
        %p237 = pneg %p87
        %p238 = pneg %p116
        %p239 = pneg %p113
        %s240 = sand.u32 %s103, 1
        %s241 = scalar_lea.sflag [#allocation4], %s240
        %s242 = sand.u32 %s103, 1
        %s243 = smul.addr %s242, 32
        %s244 = scalar_lea.vmem [#allocation7], %s243
        %p245 = pneg %p142
        %p246 = pneg %p139
        %s247 = sand.u32 %s129, 1
        %s248 = scalar_lea.sflag [#allocation9], %s247
        %s249 = sand.u32 %s129, 1
        %s250 = smul.addr %s249, 32
        %s251 = scalar_lea.vmem [#allocation8], %s250
        %p252 = scmp.eq.s32.totalorder %s32, 0
        // Predicated region
        $region37: #{tpu_custom_call.1} parent=27 // pred_check
          %p253 = pneg %p252
        $region38: #{tpu_custom_call.1} parent=27 // pred_check_branch
          %255 = sbr.rel (%p253) target = $region40
        $region39: #{tpu_custom_call.1} parent=27 // pred_region
          %256 = vst [vmem:[%s244] sm:$0xff] 0.0
          %257 = vst [vmem:[%s244 + $0x8] sm:$0xff] 0.0
          %258 = vst [vmem:[%s244 + $0x10] sm:$0xff] 0.0
          %259 = vst [vmem:[%s244 + $0x18] sm:$0xff] 0.0
          %260 = vst [vmem:[%s251] sm:$0xff] 0.0
          %261 = vst [vmem:[%s251 + $0x8] sm:$0xff] 0.0
          %262 = vst [vmem:[%s251 + $0x10] sm:$0xff] 0.0
          %263 = vst [vmem:[%s251 + $0x18] sm:$0xff] 0.0
        $region40: #{tpu_custom_call.1} parent=27 // pred_fallthru
          _
        %v264 = vld [vmem:[%s220] sm:$0x1]
        %v265 = vunpack.c.0.s8 %v264
        %v266 = vld [vmem:[%s212] sm:$0x3]
        %v267 = vmul.f32 %v266, 0.5
        %v268 = vtanh.pop %v267
        %v269 = vmul.f32 %v268, 0.5
        %v270 = vadd.f32 %v269, 0.5
        %vm271 = vcmp.eq.s32.totalorder %v265, 0
        %v272 = vsel %vm271, %v270, 0.0
        %v273 = vsel %vm271, 1, 0
        %v274 = vcvt.s32.f32 %v273
        %v275 = vadd.f32 %v270, %v274
        %v276 = vld [vmem:[%s244] sm:$0x1]
        %vm277 = vcmask 1041408
        %v278 = vsel %vm277, %v272, 0.0
        %v279 = vrot.slane %v278, 4
        %v280 = vadd.f32 %v278, %v279
        %v281 = vrot.slane %v280, 2
        %v282 = vadd.f32 %v280, %v281
        %v283 = vrot.slane %v282, 1
        %v284 = vadd.f32 %v282, %v283
        %v285 = vadd.f32 %v276, %v284
        %286 = vst [vmem:[%s244] sm:$0x1] %v285
        %v287 = vld [vmem:[%s251] sm:$0x1]
        %v288 = vsel %vm277, %v275, 0.0
        %v289 = vrot.slane %v288, 4
        %v290 = vadd.f32 %v288, %v289
        %v291 = vrot.slane %v290, 2
        %v292 = vadd.f32 %v290, %v291
        %v293 = vrot.slane %v292, 1
        %v294 = vadd.f32 %v292, %v293
        %v295 = vadd.f32 %v287, %v294
        %296 = vst [vmem:[%s251] sm:$0x1] %v295
        %s297 = scalar_lea.vmem %s212, 2 [#allocation2]
        %v298 = vld [vmem:[%s297] sm:$0x3]
        %v299 = vmul.f32 %v298, 0.5
        %v300 = vtanh.pop %v299
        %v301 = vmul.f32 %v300, 0.5
        %v302 = vadd.f32 %v301, 0.5
        %vm303 = vcmp.eq.s32.totalorder %v265, 1
        %v304 = vsel %vm303, %v302, 0.0
        %v305 = vsel %vm303, 1, 0
        %v306 = vcvt.s32.f32 %v305
        %v307 = vadd.f32 %v302, %v306
        %s308 = scalar_lea.vmem %s244, 8 [#allocation7]
        %v309 = vld [vmem:[%s308] sm:$0x1]
        %v310 = vsel %vm277, %v304, 0.0
        %v311 = vrot.slane %v310, 4
        %v312 = vadd.f32 %v310, %v311
        %v313 = vrot.slane %v312, 2
        %v314 = vadd.f32 %v312, %v313
        %v315 = vrot.slane %v314, 1
        %v316 = vadd.f32 %v314, %v315
        %v317 = vadd.f32 %v309, %v316
        %318 = vst [vmem:[%s308] sm:$0x1] %v317
        %s319 = scalar_lea.vmem %s251, 8 [#allocation8]
        %v320 = vld [vmem:[%s319] sm:$0x1]
        %v321 = vsel %vm277, %v307, 0.0
        %v322 = vrot.slane %v321, 4
        %v323 = vadd.f32 %v321, %v322
        %v324 = vrot.slane %v323, 2
        %v325 = vadd.f32 %v323, %v324
        %v326 = vrot.slane %v325, 1
        %v327 = vadd.f32 %v325, %v326
        %v328 = vadd.f32 %v320, %v327
        %329 = vst [vmem:[%s319] sm:$0x1] %v328
        %s330 = scalar_lea.vmem %s212, 4 [#allocation2]
        %v331 = vld [vmem:[%s330] sm:$0x3]
        %v332 = vmul.f32 %v331, 0.5
        %v333 = vtanh.pop %v332
        %v334 = vmul.f32 %v333, 0.5
        %v335 = vadd.f32 %v334, 0.5
        %vm336 = vcmp.eq.s32.totalorder %v265, 2
        %v337 = vsel %vm336, %v335, 0.0
        %v338 = vsel %vm336, 1, 0
        %v339 = vcvt.s32.f32 %v338
        %v340 = vadd.f32 %v335, %v339
        %s341 = scalar_lea.vmem %s244, 16 [#allocation7]
        %v342 = vld [vmem:[%s341] sm:$0x1]
        %v343 = vsel %vm277, %v337, 0.0
        %v344 = vrot.slane %v343, 4
        %v345 = vadd.f32 %v343, %v344
        %v346 = vrot.slane %v345, 2
        %v347 = vadd.f32 %v345, %v346
        %v348 = vrot.slane %v347, 1
        %v349 = vadd.f32 %v347, %v348
        %v350 = vadd.f32 %v342, %v349
        %351 = vst [vmem:[%s341] sm:$0x1] %v350
        %s352 = scalar_lea.vmem %s251, 16 [#allocation8]
        %v353 = vld [vmem:[%s352] sm:$0x1]
        %v354 = vsel %vm277, %v340, 0.0
        %v355 = vrot.slane %v354, 4
        %v356 = vadd.f32 %v354, %v355
        %v357 = vrot.slane %v356, 2
        %v358 = vadd.f32 %v356, %v357
        %v359 = vrot.slane %v358, 1
        %v360 = vadd.f32 %v358, %v359
        %v361 = vadd.f32 %v353, %v360
        %362 = vst [vmem:[%s352] sm:$0x1] %v361
        %s363 = scalar_lea.vmem %s212, 6 [#allocation2]
        %v364 = vld [vmem:[%s363] sm:$0x3]
        %v365 = vmul.f32 %v364, 0.5
        %v366 = vtanh.pop %v365
        %v367 = vmul.f32 %v366, 0.5
        %v368 = vadd.f32 %v367, 0.5
        %vm369 = vcmp.eq.s32.totalorder %v265, 3
        %v370 = vsel %vm369, %v368, 0.0
        %v371 = vsel %vm369, 1, 0
        %v372 = vcvt.s32.f32 %v371
        %v373 = vadd.f32 %v368, %v372
        %s374 = scalar_lea.vmem %s244, 24 [#allocation7]
        %v375 = vld [vmem:[%s374] sm:$0x1]
        %v376 = vsel %vm277, %v370, 0.0
        %v377 = vrot.slane %v376, 4
        %v378 = vadd.f32 %v376, %v377
        %v379 = vrot.slane %v378, 2
        %v380 = vadd.f32 %v378, %v379
        %v381 = vrot.slane %v380, 1
        %v382 = vadd.f32 %v380, %v381
        %v383 = vadd.f32 %v375, %v382
        %384 = vst [vmem:[%s374] sm:$0x1] %v383
        %s385 = scalar_lea.vmem %s251, 24 [#allocation8]
        %v386 = vld [vmem:[%s385] sm:$0x1]
        %v387 = vsel %vm277, %v373, 0.0
        %v388 = vrot.slane %v387, 4
        %v389 = vadd.f32 %v387, %v388
        %v390 = vrot.slane %v389, 2
        %v391 = vadd.f32 %v389, %v390
        %v392 = vrot.slane %v391, 1
        %v393 = vadd.f32 %v391, %v392
        %v394 = vadd.f32 %v386, %v393
        %395 = vst [vmem:[%s385] sm:$0x1] %v394
        %s396 = sand.u32 %s103, 1
        %s397 = scalar_lea.sflag [#allocation4], %s396
        %s398 = sand.u32 %s103, 1
        %s399 = smul.addr %s398, 32
        %s400 = scalar_lea.vmem [#allocation7], %s399
        %s401 = sand.u32 %s129, 1
        %s402 = scalar_lea.sflag [#allocation9], %s401
        %s403 = sand.u32 %s129, 1
        %s404 = smul.addr %s403, 32
        %s405 = scalar_lea.vmem [#allocation8], %s404
        // Predicated region
        $region41: #{tpu_custom_call.1} parent=27 // pred_check
          %p406 = pneg %p113
        $region42: #{tpu_custom_call.1} parent=27 // pred_check_branch
          %408 = sbr.rel (%p406) target = $region44
        $region43: #{tpu_custom_call.1} parent=27 // pred_region
          %s410 = ssub.s32 512, 512
          %411 = vsyncadd %s397, %s410
          %s412 = smul.addr %s31, 4
          %s413 = smul.addr %s412, 128
          %s414 = scalar_lea.hbm %s2, %s413
          %s415 = sshll.u32 %s400, 4
          %s416 = int_to_ptr.vmem [resolvable:$true] %s415
          %421 = dma.vmem_to_hbm [thread:$0]  %s416, 512, %s414, %s397, 128, 128, 8
        $region44: #{tpu_custom_call.1} parent=27 // pred_fallthru
          _
        // Predicated region
        $region45: #{tpu_custom_call.1} parent=27 // pred_check
          %p422 = pneg %p139
        $region46: #{tpu_custom_call.1} parent=27 // pred_check_branch
          %424 = sbr.rel (%p422) target = $region48
        $region47: #{tpu_custom_call.1} parent=27 // pred_region
          %s426 = ssub.s32 512, 512
          %427 = vsyncadd %s402, %s426
          %s428 = smul.addr %s31, 4
          %s429 = smul.addr %s428, 128
          %s430 = scalar_lea.hbm %s3, %s429
          %s431 = sshll.u32 %s405, 4
          %s432 = int_to_ptr.vmem [resolvable:$true] %s431
          %437 = dma.vmem_to_hbm [thread:$0]  %s432, 512, %s430, %s402, 128, 128, 8
        $region48: #{tpu_custom_call.1} parent=27 // pred_fallthru
          _
      $region28: #{tpu_custom_call.1} parent=5 // pred_fallthru
        _
      %p438 = scmp.le.s32.totalorder 2, %s22
      // Predicated region
      $region49: #{tpu_custom_call.1} parent=5 // pred_check
        %p439 = pneg %p438
      $region50: #{tpu_custom_call.1} parent=5 // pred_check_branch
        %441 = sbr.rel (%p439) target = $region52
      $region51: #{tpu_custom_call.1} parent=5 // pred_region
        %s442 = ssub.s32 %s22, 2
        // Predicated region
        $region53: #{tpu_custom_call.1} parent=51 // pred_check
          %p443 = pneg %p119
        $region54: #{tpu_custom_call.1} parent=51 // pred_check_branch
          %445 = sbr.rel (%p443) target = $region56
        $region55: #{tpu_custom_call.1} parent=51 // pred_region
          %s446 = sand.u32 %s104, 1
          %s447 = scalar_lea.sflag [#allocation4], %s446
          %s448 = sand.u32 %s104, 1
          %s449 = smul.addr %s448, 32
          %s450 = scalar_lea.vmem [#allocation7], %s449
          %451 = dma.done %s447, 512
        $region56: #{tpu_custom_call.1} parent=51 // pred_fallthru
          _
        // Predicated region
        $region57: #{tpu_custom_call.1} parent=51 // pred_check
          %p452 = pneg %p145
        $region58: #{tpu_custom_call.1} parent=51 // pred_check_branch
          %454 = sbr.rel (%p452) target = $region60
        $region59: #{tpu_custom_call.1} parent=51 // pred_region
          %s455 = sand.u32 %s130, 1
          %s456 = scalar_lea.sflag [#allocation9], %s455
          %s457 = sand.u32 %s130, 1
          %s458 = smul.addr %s457, 32
          %s459 = scalar_lea.vmem [#allocation8], %s458
          %460 = dma.done %s456, 512
        $region60: #{tpu_custom_call.1} parent=51 // pred_fallthru
          _
      $region52: #{tpu_custom_call.1} parent=5 // pred_fallthru
        _
    $region6: #{tpu_custom_call.1} parent=1 // loop_footer
      %s26 = sadd.s32 1, %s22
    $region7: #{tpu_custom_call.1} parent=1 // loop_footer_branch
      %21 = sbr.rel target = $region3
    $region8: #{tpu_custom_call.1} parent=1 // loop_exit
      _
    %461 = vsyncpa [#allocation3], 1
    %s462 = scalar_lea.sflag [#allocation3], 1
    %463 = vsyncpa %s462, 1
    %464 = vsyncpa [#allocation6], 1
    %s465 = scalar_lea.sflag [#allocation6], 1
    %466 = vsyncpa %s465, 1
    %467 = vsyncpa [#allocation4], 1
    %s468 = scalar_lea.sflag [#allocation4], 1
    %469 = vsyncpa %s468, 1
    %470 = vsyncpa [#allocation9], 1
    %s471 = scalar_lea.sflag [#allocation9], 1
    %472 = vsyncpa %s471, 1

</llo_original>
